<compile_context>
chip_gen: v7x
topology: tpu7x:2x2x1
jax: 0.10.0
libtpu: 0.0.40
codegen_flags: <defaults>
</compile_context>

<pallas_src>
import jax
import jax.numpy as jnp
from jax.experimental import pallas as pl
from jax.experimental.pallas import tpu as pltpu


def _round_up(v, m):
    return (v + m - 1) // m * m


def _patch_embed_kernel(x_ref, w_ref, b_ref, o_ref, acc_ref):
    # x_ref: (tm, tk) bf16, w_ref: (tk, tn) bf16, b_ref: (1, tn) f32,
    # o_ref: (tm, tn) out dtype, acc_ref: (tm, tn) f32 scratch.
    k = pl.program_id(2)

    @pl.when(k == 0)
    def _():
        acc_ref[...] = jnp.zeros_like(acc_ref)

    acc_ref[...] += jnp.dot(
        x_ref[...], w_ref[...], preferred_element_type=jnp.float32
    )

    @pl.when(k == pl.num_programs(2) - 1)
    def _():
        o_ref[...] = (acc_ref[...] + b_ref[...]).astype(o_ref.dtype)


def _tiled_matmul_bias(x_pad, w_pad, b_pad, out_dtype, tm, tn, tk):
    Mp, Kp = x_pad.shape
    Ep = w_pad.shape[1]
    grid = (Mp // tm, Ep // tn, Kp // tk)

    flops = 2 * Mp * Kp * Ep
    bytes_accessed = (
        x_pad.size * x_pad.dtype.itemsize
        + w_pad.size * w_pad.dtype.itemsize
        + b_pad.size * b_pad.dtype.itemsize
        + Mp * Ep * jnp.dtype(out_dtype).itemsize
    )

    return pl.pallas_call(
        _patch_embed_kernel,
        out_shape=jax.ShapeDtypeStruct((Mp, Ep), out_dtype),
        grid_spec=pltpu.PrefetchScalarGridSpec(
            num_scalar_prefetch=0,
            grid=grid,
            in_specs=[
                pl.BlockSpec((tm, tk), lambda i, j, k: (i, k)),   # activations
                pl.BlockSpec((tk, tn), lambda i, j, k: (k, j)),   # weight (K, E)
                pl.BlockSpec((1, tn), lambda i, j, k: (0, j)),    # bias
            ],
            out_specs=pl.BlockSpec((tm, tn), lambda i, j, k: (i, j)),
            scratch_shapes=[pltpu.VMEM((tm, tn), jnp.float32)],
        ),
        compiler_params=pltpu.CompilerParams(
            dimension_semantics=("parallel", "parallel", "arbitrary"),
            vmem_limit_bytes=64 * 1024 * 1024,
        ),
        cost_estimate=pl.CostEstimate(
            flops=flops, transcendentals=0, bytes_accessed=bytes_accessed
        ),
    )(x_pad, w_pad, b_pad)


def make_patch_embedding(weight, bias, patch_size, *, compute_dtype=jnp.bfloat16):
    """Build a PatchEmbedding forward with parameters prepared once.

    weight: (E, P*C) PyTorch nn.Linear layout; bias: (E,).
    Returns apply(x) with x: (B, L, C) -> (B, L//P, E).
    """
    E, K = weight.shape

    # Lane-aligned K/E tiles (128-aligned); M-tile is chosen per call.
    tk = min(512, _round_up(K, 128))
    tn = min(256, _round_up(E, 128))
    Kp, Ep = _round_up(K, tk), _round_up(E, tn)

    # One-time parameter prep: transpose to (K, E), zero-pad, cast to bf16.
    w_t = jnp.pad(weight.T.astype(compute_dtype), ((0, Kp - K), (0, Ep - E)))
    b2 = jnp.pad(bias.astype(jnp.float32).reshape(1, E), ((0, 0), (0, Ep - E)))

    @jax.jit
    def apply(x):
        B, L, C = x.shape
        assert L % patch_size == 0, "Sequence length must be divisible by patch size"
        assert patch_size * C == K, "input_dim * patch_size must match weight"
        N = L // patch_size
        M = B * N

        tm = min(512, _round_up(M, 16))       # 16-sublane aligned for bf16
        Mp = _round_up(M, tm)

        x_flat = x.reshape(M, K).astype(compute_dtype)
        x_pad = jnp.pad(x_flat, ((0, Mp - M), (0, Kp - K)))

        out = _tiled_matmul_bias(x_pad, w_t, b2, x.dtype, tm, tn, tk)
        return out[:M, :E].reshape(B, N, E)

    return apply


def _reference(x, weight, bias, patch_size):
    B, L, C = x.shape
    N = L // patch_size
    return x.reshape(B, N, patch_size * C) @ weight.T + bias


if __name__ == "__main__":
    key = jax.random.PRNGKey(0)

    # --- Test 1: shapes implied by the module spec (small) ---------------------
    B, L, C = 2, 16, 4
    patch_size = 4
    embed_dim = 32
    in_features = patch_size * C

    k1, k2, k3, k4, k5, k6 = jax.random.split(key, 6)
    x = jax.random.normal(k1, (B, L, C), dtype=jnp.float32)
    weight = jax.random.normal(k2, (embed_dim, in_features), dtype=jnp.float32) * 0.02
    bias = jax.random.normal(k3, (embed_dim,), dtype=jnp.float32) * 0.02

    fwd = make_patch_embedding(weight, bias, patch_size)
    out = jax.block_until_ready(fwd(x))

    ref = _reference(x, weight, bias, patch_size)
    assert out.shape == (B, L // patch_size, embed_dim)
    assert jnp.allclose(out, ref, atol=2e-2, rtol=2e-2), "test 1 mismatch"

    # --- Test 2: exercises a multi-tile grid and padding path -------------------
    B2, L2, C2 = 2, 2048, 32
    patch2, embed2 = 4, 256
    x2 = jax.random.normal(k4, (B2, L2, C2), dtype=jnp.float32)
    w2 = jax.random.normal(k5, (embed2, patch2 * C2), dtype=jnp.float32) * 0.02
    b2_ = jax.random.normal(k6, (embed2,), dtype=jnp.float32) * 0.02

    fwd2 = make_patch_embedding(w2, b2_, patch2)
    out2 = jax.block_until_ready(fwd2(x2))
    ref2 = _reference(x2, w2, b2_, patch2)
    assert out2.shape == (B2, L2 // patch2, embed2)
    assert jnp.allclose(out2, ref2, atol=3e-2, rtol=3e-2), "test 2 mismatch"

    print("KERNEL_OK")
</pallas_src>

<mosaic_0001>
module attributes {stable_mosaic.version = 11 : i64} {
  func.func @_patch_embed_kernel(%arg0: i32, %arg1: i32, %arg2: i32, %arg3: memref<16x128xbf16, #tpu.memory_space<vmem>>, %arg4: memref<128x128xbf16, #tpu.memory_space<vmem>>, %arg5: memref<1x128xf32, #tpu.memory_space<vmem>>, %arg6: memref<16x128xf32, #tpu.memory_space<vmem>>, %arg7: memref<16x128xf32, #tpu.memory_space<vmem>>) attributes {dimension_semantics = [#tpu.dimension_semantics<parallel>, #tpu.dimension_semantics<parallel>, #tpu.dimension_semantics<arbitrary>], iteration_bounds = array<i64: 1, 1, 1>, scalar_prefetch = 0 : i64, scratch_operands = 1 : i64, tpu.core_type = #tpu.core_type<tc>, window_params = [{transform_indices = @transform_0, window_bounds = array<i64: 16, 128>}, {transform_indices = @transform_1, window_bounds = array<i64: 128, 128>}, {transform_indices = @transform_2, window_bounds = array<i64: 1, 128>}, {transform_indices = @transform_3, window_bounds = array<i64: 16, 128>}]} {
    %c0_i32 = arith.constant 0 : i32
    %0 = arith.cmpi eq, %arg2, %c0_i32 : i32
    %1 = arith.extui %0 : i1 to i32
    %c0_i32_0 = arith.constant 0 : i32
    %2 = arith.cmpi ne, %1, %c0_i32_0 : i32
    scf.if %2 {
      %cst_10 = arith.constant 0.000000e+00 : f32
      %12 = vector.broadcast %cst_10 : f32 to vector<16x128xf32>
      %c0_11 = arith.constant 0 : index
      %c0_12 = arith.constant 0 : index
      %13 = vector.load %arg7[%c0_11, %c0_12] : memref<16x128xf32, #tpu.memory_space<vmem>>, vector<16x128xf32>
      tpu.vector_store %arg7[%c0_11, %c0_12], %12 {strides = array<i32>} : memref<16x128xf32, #tpu.memory_space<vmem>>, vector<16x128xf32>,
    } else {
    }
    %c0 = arith.constant 0 : index
    %c0_1 = arith.constant 0 : index
    %3 = vector.load %arg7[%c0, %c0_1] : memref<16x128xf32, #tpu.memory_space<vmem>>, vector<16x128xf32>
    %c0_2 = arith.constant 0 : index
    %c0_3 = arith.constant 0 : index
    %4 = vector.load %arg3[%c0_2, %c0_3] : memref<16x128xbf16, #tpu.memory_space<vmem>>, vector<16x128xbf16>
    %c0_4 = arith.constant 0 : index
    %c0_5 = arith.constant 0 : index
    %5 = vector.load %arg4[%c0_4, %c0_5] : memref<128x128xbf16, #tpu.memory_space<vmem>>, vector<128x128xbf16>
    %cst = arith.constant dense<0.000000e+00> : vector<16x128xf32>
    %6 = tpu.matmul %4, %5, %cst {dimension_numbers = #tpu.dot_dimension_numbers<[1], [0], [0], [1], [0, 0, 1, 1], [], []>} : vector<16x128xbf16>, vector<128x128xbf16>, vector<16x128xf32> -> vector<16x128xf32>
    %7 = arith.addf %3, %6 : vector<16x128xf32>
    %c0_6 = arith.constant 0 : index
    %c0_7 = arith.constant 0 : index
    %8 = vector.load %arg7[%c0_6, %c0_7] : memref<16x128xf32, #tpu.memory_space<vmem>>, vector<16x128xf32>
    tpu.vector_store %arg7[%c0_6, %c0_7], %7 {strides = array<i32>} : memref<16x128xf32, #tpu.memory_space<vmem>>, vector<16x128xf32>,
    %c0_i32_8 = arith.constant 0 : i32
    %9 = arith.cmpi eq, %arg2, %c0_i32_8 : i32
    %10 = arith.extui %9 : i1 to i32
    %c0_i32_9 = arith.constant 0 : i32
    %11 = arith.cmpi ne, %10, %c0_i32_9 : i32
    scf.if %11 {
      %c0_10 = arith.constant 0 : index
      %c0_11 = arith.constant 0 : index
      %12 = vector.load %arg7[%c0_10, %c0_11] : memref<16x128xf32, #tpu.memory_space<vmem>>, vector<16x128xf32>
      %c0_12 = arith.constant 0 : index
      %c0_13 = arith.constant 0 : index
      %13 = vector.load %arg5[%c0_12, %c0_13] : memref<1x128xf32, #tpu.memory_space<vmem>>, vector<1x128xf32>
      %14 = vector.broadcast %13 : vector<1x128xf32> to vector<16x128xf32>
      %15 = arith.addf %12, %14 : vector<16x128xf32>
      %c0_14 = arith.constant 0 : index
      %c0_15 = arith.constant 0 : index
      %16 = vector.load %arg6[%c0_14, %c0_15] : memref<16x128xf32, #tpu.memory_space<vmem>>, vector<16x128xf32>
      tpu.vector_store %arg6[%c0_14, %c0_15], %15 {strides = array<i32>} : memref<16x128xf32, #tpu.memory_space<vmem>>, vector<16x128xf32>,
    } else {
    }
    return
  }
  func.func @transform_0(%arg0: i32, %arg1: i32, %arg2: i32) -> (i32, i32) {
    %c0_i32 = arith.constant 0 : i32
    return %arg0, %arg2 : i32, i32
  }
  func.func @transform_1(%arg0: i32, %arg1: i32, %arg2: i32) -> (i32, i32) {
    %c0_i32 = arith.constant 0 : i32
    return %arg2, %arg1 : i32, i32
  }
  func.func @transform_2(%arg0: i32, %arg1: i32, %arg2: i32) -> (i32, i32) {
    %c0_i32 = arith.constant 0 : i32
    %c0_i32_0 = arith.constant 0 : i32
    return %c0_i32, %arg1 : i32, i32
  }
  func.func @transform_3(%arg0: i32, %arg1: i32, %arg2: i32) -> (i32, i32) {
    %c0_i32 = arith.constant 0 : i32
    return %arg0, %arg1 : i32, i32
  }
}

</mosaic_0001>

<llo_original>
// kernel: apply.1
$region0: #{apply.1}
  #allocation0 [shape = 'u32[]', space=smem, size = 0x4, offset = 0x4, fixed_abs, tag = 'smem constant byte address 0x4 - core index']
  #allocation1 [shape = 'u32[144,128]{1,0:T(1,128)}', space=vmem, size = 0x12000, scoped, tag = 'internal scratch']
  #allocation2 [shape = 'f32[16,128]{1,0:T(8,128)}', space=vmem, size = 0x2000, scoped, tag = 'scratch operand']
  %s0 = inlined_call_operand.hbm [shape: bf16[16,128], index: 0, kind: input, shape index: {}]
  %s1 = inlined_call_operand.hbm [shape: bf16[128,128], index: 1, kind: input, shape index: {}]
  %s2 = inlined_call_operand.hbm [shape: f32[1,128], index: 2, kind: input, shape index: {}]
  %s3 = inlined_call_operand.hbm [shape: f32[16,128], index: 3, kind: output, shape index: {}]
  %s4 = sld [smem:[#allocation0]]
  $region42: #{apply.1} parent=0
    _
  %s6 = ssub.s32 1, %s4
  %s7 = scalar_select 0, %s6, %s4
  $region1: #{apply.1} parent=0
    #allocation3 [shape = 'u8[4096]{0}', space=vmem, size = 0x1000, scoped, tag = 'input window, operand 0, single buffered']
    #allocation4 [shape = 's32[1]{0}', space=sflag, size = 0x4, scoped, tag = 'scoped memory for apply.1']
    #allocation5 [shape = 's32[1]{0}', space=sflag, size = 0x4, scoped, tag = 'scoped memory for apply.1']
    #allocation6 [shape = 'u8[32768]{0}', space=vmem, size = 0x8000, scoped, tag = 'input window, operand 1, single buffered']
    #allocation7 [shape = 's32[1]{0}', space=sflag, size = 0x4, scoped, tag = 'scoped memory for apply.1']
    #allocation8 [shape = 'u8[512]{0}', space=vmem, size = 0x400, scoped, tag = 'input window, operand 2, single buffered']
    #allocation9 [shape = 'u8[8192]{0}', space=vmem, size = 0x2000, scoped, tag = 'output window, operand 0, single buffered']
    %8 = vsyncpa [#allocation4], 0
    %9 = vsyncpa [#allocation7], 0
    %10 = vsyncpa [#allocation5], 0
    // Predicated region
    $region2: #{apply.1} parent=1 // pred_check
      _
    $region3: #{apply.1} parent=1 // pred_check_branch
      %12 = sbr.rel (0) target = $region5
    $region4: #{apply.1} parent=1 // pred_region
      %s14 = ssub.s32 128, 128
      %15 = vsyncadd [#allocation4], %s14
      %s16 = sshll.u32 [#allocation3], 4
      %s17 = int_to_ptr.vmem [resolvable:$true] %s16
      %22 = dma.hbm_to_vmem [thread:$0]  %s0, 128, %s17, [#allocation4], 64, 64, 4
    $region5: #{apply.1} parent=1 // pred_fallthru
      _
    // Predicated region
    $region6: #{apply.1} parent=1 // pred_check
      _
    $region7: #{apply.1} parent=1 // pred_check_branch
      %24 = sbr.rel (0) target = $region9
    $region8: #{apply.1} parent=1 // pred_region
      %s26 = ssub.s32 1024, 1024
      %27 = vsyncadd [#allocation7], %s26
      %s28 = sshll.u32 [#allocation6], 4
      %s29 = int_to_ptr.vmem [resolvable:$true] %s28
      %34 = dma.hbm_to_vmem [thread:$0]  %s1, 1024, %s29, [#allocation7], 64, 64, 4
    $region9: #{apply.1} parent=1 // pred_fallthru
      _
    // Predicated region
    $region10: #{apply.1} parent=1 // pred_check
      _
    $region11: #{apply.1} parent=1 // pred_check_branch
      %36 = sbr.rel (0) target = $region13
    $region12: #{apply.1} parent=1 // pred_region
      %s38 = ssub.s32 16, 16
      %39 = vsyncadd [#allocation7], %s38
      %s41 = sshll.u32 [#allocation8], 4
      %s42 = int_to_ptr.vmem [resolvable:$true] %s41
      %44 = dma.hbm_to_vmem [thread:$0]  %s2, 16, %s42, [#allocation7]
    $region13: #{apply.1} parent=1 // pred_fallthru
      _
    // Predicated region
    $region14: #{apply.1} parent=1 // pred_check
      _
    $region15: #{apply.1} parent=1 // pred_check_branch
      %46 = sbr.rel (0) target = $region17
    $region16: #{apply.1} parent=1 // pred_region
      %47 = dma.done [#allocation4], 128
    $region17: #{apply.1} parent=1 // pred_fallthru
      _
    // Predicated region
    $region18: #{apply.1} parent=1 // pred_check
      _
    $region19: #{apply.1} parent=1 // pred_check_branch
      %49 = sbr.rel (0) target = $region21
    $region20: #{apply.1} parent=1 // pred_region
      %50 = dma.done [#allocation7], 1024
    $region21: #{apply.1} parent=1 // pred_fallthru
      _
    // Predicated region
    $region22: #{apply.1} parent=1 // pred_check
      _
    $region23: #{apply.1} parent=1 // pred_check_branch
      %52 = sbr.rel (0) target = $region25
    $region24: #{apply.1} parent=1 // pred_region
      %53 = dma.done [#allocation7], 16
    $region25: #{apply.1} parent=1 // pred_fallthru
      _
    %p55 = scmp.eq.s32.totalorder 0, 0
    // Predicated region
    $region26: #{apply.1} parent=1 // pred_check
      %p56 = pneg %p55
    $region27: #{apply.1} parent=1 // pred_check_branch
      %58 = sbr.rel (%p56) target = $region29
    $region28: #{apply.1} parent=1 // pred_region
      %59 = vst [vmem:[#allocation2] sm:$0xff] 0.0
      %60 = vst [vmem:[#allocation2 + $0x8] sm:$0xff] 0.0
    $region29: #{apply.1} parent=1 // pred_fallthru
      _
    %v61 = vld [vmem:[#allocation2] sm:$0xff]
    %v62 = vld [vmem:[#allocation2 + $0x8] sm:$0xff]
    %v63 = vld [vmem:[#allocation3] sm:$0xf]
    %v64 = vld [vmem:[#allocation3 + $0x4] sm:$0xf]
    %v65 = vld [vmem:[#allocation6] sm:$0xf]
    %v66 = vld [vmem:[#allocation6 + $0x4] sm:$0xf]
    %v67 = vld [vmem:[#allocation6 + $0x8] sm:$0xf]
    %v68 = vld [vmem:[#allocation6 + $0xc] sm:$0xf]
    %v69 = vld [vmem:[#allocation6 + $0x10] sm:$0xf]
    %v70 = vld [vmem:[#allocation6 + $0x14] sm:$0xf]
    %v71 = vld [vmem:[#allocation6 + $0x18] sm:$0xf]
    %v72 = vld [vmem:[#allocation6 + $0x1c] sm:$0xf]
    %v73 = vld [vmem:[#allocation6 + $0x20] sm:$0xf]
    %v74 = vld [vmem:[#allocation6 + $0x24] sm:$0xf]
    %v75 = vld [vmem:[#allocation6 + $0x28] sm:$0xf]
    %v76 = vld [vmem:[#allocation6 + $0x2c] sm:$0xf]
    %v77 = vld [vmem:[#allocation6 + $0x30] sm:$0xf]
    %v78 = vld [vmem:[#allocation6 + $0x34] sm:$0xf]
    %v79 = vld [vmem:[#allocation6 + $0x38] sm:$0xf]
    %v80 = vld [vmem:[#allocation6 + $0x3c] sm:$0xf]
    %v83 = vunpack.c.l.b16 %v63
    %v84 = vunpack.c.l.b16 %v64
    %v85 = vpack.c.b16 %v84, %v83
    %v103 = vunpack.c.l.b16 %v65
    %v104 = vunpack.c.l.b16 %v66
    %v105 = vunpack.c.l.b16 %v67
    %v106 = vunpack.c.l.b16 %v68
    %v107 = vunpack.c.l.b16 %v69
    %v108 = vunpack.c.l.b16 %v70
    %v109 = vunpack.c.l.b16 %v71
    %v110 = vunpack.c.l.b16 %v72
    %v111 = vunpack.c.l.b16 %v73
    %v112 = vunpack.c.l.b16 %v74
    %v113 = vunpack.c.l.b16 %v75
    %v114 = vunpack.c.l.b16 %v76
    %v115 = vunpack.c.l.b16 %v77
    %v116 = vunpack.c.l.b16 %v78
    %v117 = vunpack.c.l.b16 %v79
    %v118 = vunpack.c.l.b16 %v80
    %v119 = vpack.c.b16 %v104, %v103
    %v120 = vpack.c.b16 %v106, %v105
    %v121 = vpack.c.b16 %v108, %v107
    %v122 = vpack.c.b16 %v110, %v109
    %v123 = vpack.c.b16 %v112, %v111
    %v124 = vpack.c.b16 %v114, %v113
    %v125 = vpack.c.b16 %v116, %v115
    %v126 = vpack.c.b16 %v118, %v117
    %135 = vmatprep.subr.bf16.mxu0 0
    %136 = vmatpush1.bf16.msra.mxu0 %v119
    %137 = vmatprep.subr.bf16.mxu0 0
    %138 = vmatpush1.bf16.msra.mxu0 %v120
    %139 = vmatprep.subr.bf16.mxu0 0
    %140 = vmatpush1.bf16.msra.mxu0 %v121
    %141 = vmatprep.subr.bf16.mxu0 0
    %142 = vmatpush1.bf16.msra.mxu0 %v122
    %143 = vmatprep.subr.bf16.mxu0 0
    %144 = vmatpush1.bf16.msra.mxu0 %v123
    %145 = vmatprep.subr.bf16.mxu0 0
    %146 = vmatpush1.bf16.msra.mxu0 %v124
    %147 = vmatprep.subr.bf16.mxu0 0
    %148 = vmatpush1.bf16.msra.mxu0 %v125
    %149 = vmatprep.subr.bf16.mxu0 0
    %150 = vmatpush1.bf16.msra.mxu0 %v126
    %151 = vmatprep.subr.bf16.mxu0 0
    %152 = vmatpush1.bf16.msra.mxu0 0
    %153 = vmatprep.subr.bf16.mxu0 0
    %154 = vmatpush1.bf16.msra.mxu0 0
    %155 = vmatprep.subr.bf16.mxu0 0
    %156 = vmatpush1.bf16.msra.mxu0 0
    %157 = vmatprep.subr.bf16.mxu0 0
    %158 = vmatpush1.bf16.msra.mxu0 0
    %159 = vmatprep.subr.bf16.mxu0 0
    %160 = vmatpush1.bf16.msra.mxu0 0
    %161 = vmatprep.subr.bf16.mxu0 0
    %162 = vmatpush1.bf16.msra.mxu0 0
    %163 = vmatprep.subr.bf16.mxu0 0
    %164 = vmatpush1.bf16.msra.mxu0 0
    %165 = vmatprep.subr.bf16.mxu0 0
    %166 = vmatpush1.bf16.msra.mxu0 0
    %167 = vmatprep.mubr.bf16.mxu0 0
    %168 = vmatmul.mubr.bf16.gmra.mrb[0].mxu0 %v85
    %v169 = vpop.f32.mrb[0].mxu0
    %v170 = vadd.f32 0.0, %v169
    %v171 = vpop.f32.mrb[0].mxu0
    %v172 = vpop.f32.mrb[0].mxu0
    %v173 = vadd.f32 0.0, %v172
    %v174 = vpop.f32.mrb[0].mxu0
    %175 = vdwg.mxu0
    %v176 = vadd.f32 %v61, %v170
    %v177 = vadd.f32 %v62, %v173
    %178 = vst [vmem:[#allocation2] sm:$0xff] %v176
    %179 = vst [vmem:[#allocation2 + $0x8] sm:$0xff] %v177
    // Predicated region
    $region30: #{apply.1} parent=1 // pred_check
      %p180 = pneg %p55
    $region31: #{apply.1} parent=1 // pred_check_branch
      %182 = sbr.rel (%p180) target = $region33
    $region32: #{apply.1} parent=1 // pred_region
      %v183 = vld [vmem:[#allocation2] sm:$0xff]
      %v184 = vld [vmem:[#allocation2 + $0x8] sm:$0xff]
      %v185 = vld [vmem:[#allocation8] sm:$0x1]
      %v187 = vlaneseq
      %v188 = vshrl.u32 %v187, 7
      %v189 = vsub.s32 0, %v188
      %v190 = vrot.slane %v185, %v189
      %v192 = vadd.f32 %v183, %v190
      %v193 = vadd.f32 %v184, %v190
      %194 = vst [vmem:[#allocation9] sm:$0xff] %v192
      %195 = vst [vmem:[#allocation9 + $0x8] sm:$0xff] %v193
    $region33: #{apply.1} parent=1 // pred_fallthru
      _
    // Predicated region
    $region34: #{apply.1} parent=1 // pred_check
      _
    $region35: #{apply.1} parent=1 // pred_check_branch
      %197 = sbr.rel (0) target = $region37
    $region36: #{apply.1} parent=1 // pred_region
      %s199 = ssub.s32 256, 256
      %200 = vsyncadd [#allocation5], %s199
      %s201 = sshll.u32 [#allocation9], 4
      %s202 = int_to_ptr.vmem [resolvable:$true] %s201
      %207 = dma.vmem_to_hbm [thread:$0]  %s202, 256, %s3, [#allocation5], 128, 128, 8
    $region37: #{apply.1} parent=1 // pred_fallthru
      _
    // Predicated region
    $region38: #{apply.1} parent=1 // pred_check
      _
    $region39: #{apply.1} parent=1 // pred_check_branch
      %209 = sbr.rel (0) target = $region41
    $region40: #{apply.1} parent=1 // pred_region
      %210 = dma.done [#allocation5], 256
    $region41: #{apply.1} parent=1 // pred_fallthru
      _
    %211 = vsyncpa [#allocation4], 1
    %212 = vsyncpa [#allocation7], 1
    %213 = vsyncpa [#allocation5], 1

</llo_original>
